<compile_context>
chip_gen: v6e
topology: v6e:2x2x1
jax: 0.10.0
libtpu: 0.0.40
codegen_flags: <defaults>
</compile_context>

<pallas_src>
import functools

import jax
import jax.numpy as jnp
import numpy as np
from jax.experimental import pallas as pl
from jax.experimental.pallas import tpu as pltpu


def _round_up(x, m):
    return ((x + m - 1) // m) * m


def _spectral_cf_kernel(w_ref, f_ref, base_ref, v_ref, vt_ref, out_ref):
    # w_ref    : SMEM (2,)    f32   softmax'd combination weights (grid-invariant)
    # f_ref    : VMEM (1, K)  f32   spectral filter response      (grid-invariant)
    # base_ref : VMEM (TB, I) f32   base-score (two-hop propagation) tile
    # v_ref    : VMEM (I, K)        eigenvectors          (f32 or bf16)
    # vt_ref   : VMEM (K, I)        eigenvectors^T, explicit lane-dense RHS
    # out_ref  : VMEM (TB, I) f32   predicted ratings tile
    base = base_ref[...]                                            # (TB, I) f32

    # filtered = ((base @ V) * f) @ V^T  -- two MXU matmuls, f32 accumulation.
    t = jnp.dot(base.astype(v_ref.dtype), v_ref[...],
                preferred_element_type=jnp.float32)                 # (TB, K)
    t = t * f_ref[...]                                              # diag(f) as broadcast
    filtered = jnp.dot(t.astype(vt_ref.dtype), vt_ref[...],
                       preferred_element_type=jnp.float32)          # (TB, I)

    # Weighted combine stays f32; w0*base uses the exact f32 base tile.
    out_ref[...] = w_ref[0] * base + w_ref[1] * filtered


@functools.partial(jax.jit, static_argnames=("tb", "mm_dtype"))
def spectral_cf_forward(base_scores, eigenvecs, eigenvals, coeffs, comb_weights,
                        *, tb=256, mm_dtype=jnp.float32):
    """Pallas forward. base_scores: (B, I), eigenvecs: (I, K), eigenvals: (K,)."""
    B, I = base_scores.shape
    K = eigenvals.shape[0]

    # --- grid-invariant work hoisted out of the kernel (depends only on params) ---
    ev = eigenvals.astype(jnp.float32)
    n_c = coeffs.shape[0]
    result = coeffs[0] * jnp.ones_like(ev)
    eig_power = ev
    for i in range(1, n_c):
        result = result + coeffs[i] * eig_power
        if i < n_c - 1:
            eig_power = eig_power * ev
    f = (jax.nn.sigmoid(result) + 1e-6).reshape(1, K).astype(jnp.float32)
    w = jax.nn.softmax(comb_weights.astype(jnp.float32))            # max-subtracted, (2,)

    base = base_scores.astype(jnp.float32)
    v = eigenvecs.astype(mm_dtype)                                  # (I, K)
    vt = eigenvecs.T.astype(mm_dtype)                               # (K, I), explicit V^T

    # Large batch tile; pad B up so every tile is full (padded rows are only
    # written to discarded output rows -- no batch-dimension reduction exists).
    tb_eff = min(tb, _round_up(B, 8))
    Bp = _round_up(B, tb_eff)
    if Bp != B:
        base = jnp.pad(base, ((0, Bp - B), (0, 0)))

    grid = (Bp // tb_eff,)
    out = pl.pallas_call(
        _spectral_cf_kernel,
        out_shape=jax.ShapeDtypeStruct((Bp, I), jnp.float32),
        grid_spec=pltpu.PrefetchScalarGridSpec(
            num_scalar_prefetch=0,
            grid=grid,
            in_specs=[
                pl.BlockSpec(memory_space=pltpu.MemorySpace.SMEM),   # w (2 scalars)
                pl.BlockSpec((1, K), lambda i: (0, 0)),              # filter response f
                pl.BlockSpec((tb_eff, I), lambda i: (i, 0)),         # base-score tile
                pl.BlockSpec((I, K), lambda i: (0, 0)),              # eigenvectors V
                pl.BlockSpec((K, I), lambda i: (0, 0)),              # eigenvectors V^T
            ],
            out_specs=pl.BlockSpec((tb_eff, I), lambda i: (i, 0)),
        ),
        compiler_params=pltpu.CompilerParams(
            dimension_semantics=("parallel",),
        ),
    )(w, f, base, v, vt)
    return out[:B]


def build_model_buffers(key, n_users, n_items, n_eigen):
    """Host-side setup glue, mirrors _setup_spectral_decomposition (dense jnp)."""
    # Synthetic non-negative interaction matrix (stands in for the sparse adj_mat).
    adj = (jax.random.uniform(key, (n_users, n_items)) < 0.1).astype(jnp.float32)

    rowsum = adj.sum(axis=1)
    d_row = jnp.power(rowsum + 1e-8, -0.5)
    d_row = jnp.where(jnp.isinf(d_row), 0.0, d_row)
    colsum = adj.sum(axis=0)
    d_col = jnp.power(colsum + 1e-8, -0.5)
    d_col = jnp.where(jnp.isinf(d_col), 0.0, d_col)
    norm_adj = d_row[:, None] * adj * d_col[None, :]

    # n_hops == 2 path
    two_hop = norm_adj @ norm_adj.T @ norm_adj            # (n_users, n_items)
    gram = two_hop.T @ two_hop                            # (n_items, n_items), PSD

    k = min(n_eigen, n_items - 2)
    # TODO(synk): scipy.sparse.linalg.eigsh(which='LM') replaced by dense eigh + top-k.
    evals, evecs = jnp.linalg.eigh(gram)                  # ascending
    eigenvals = jnp.maximum(evals[-k:][::-1], 0.0)        # largest k
    eigenvecs = evecs[:, -k:][:, ::-1]
    return norm_adj, two_hop, eigenvals, eigenvecs


def reference_forward(base_scores, eigenvecs, eigenvals, coeffs, comb_weights):
    """Pure-jnp reference identical to the PyTorch forward."""
    result = coeffs[0] * jnp.ones_like(eigenvals)
    eig_power = eigenvals
    for i in range(1, coeffs.shape[0]):
        result = result + coeffs[i] * eig_power
        if i < coeffs.shape[0] - 1:
            eig_power = eig_power * eigenvals
    f = jax.nn.sigmoid(result) + 1e-6
    filter_matrix = (eigenvecs * f[None, :]) @ eigenvecs.T
    filtered = jnp.dot(base_scores, filter_matrix, precision=jax.lax.Precision.HIGHEST)
    w = jax.nn.softmax(comb_weights)
    return w[0] * base_scores + w[1] * filtered


if __name__ == "__main__":
    n_users, n_items, n_eigen = 128, 256, 128
    batch = 512
    filter_order = 6

    key = jax.random.PRNGKey(0)
    k_adj, k_users = jax.random.split(key)

    norm_adj, two_hop_adj, eigenvals, eigenvecs = build_model_buffers(
        k_adj, n_users, n_items, n_eigen)

    # Learnable parameters, deterministic init matching the module's __init__.
    coeffs = jnp.array([1.0, -0.5, 0.1, -0.02, 0.004, -0.0008, 0.00015],
                       dtype=jnp.float32)[: filter_order + 1]
    comb_weights = jnp.array([0.6, 0.4], dtype=jnp.float32)

    # Forward: users -> base_scores (n_hops=2 => two_hop_adj rows). Gather is glue.
    users = jax.random.randint(k_users, (batch,), 0, n_users)
    base_scores = two_hop_adj[users]                      # (batch, n_items)

    ref = reference_forward(base_scores, eigenvecs, eigenvals, coeffs, comb_weights)

    # f32 MXU-operand path (default; exact on v5e and everywhere else).
    pred_f32 = spectral_cf_forward(base_scores, eigenvecs, eigenvals, coeffs,
                                   comb_weights, tb=256, mm_dtype=jnp.float32)
    pred_f32 = jax.block_until_ready(pred_f32)
    np.testing.assert_allclose(np.asarray(pred_f32), np.asarray(ref),
                               rtol=1e-2, atol=1e-3)

    # bf16 MXU-operand path (full-rate MXU on v6e/v7x); accumulation stays f32.
    pred_bf16 = spectral_cf_forward(base_scores, eigenvecs, eigenvals, coeffs,
                                    comb_weights, tb=256, mm_dtype=jnp.bfloat16)
    pred_bf16 = jax.block_until_ready(pred_bf16)
    np.testing.assert_allclose(np.asarray(pred_bf16), np.asarray(ref),
                               rtol=5e-2, atol=5e-3)

    print("KERNEL_OK")
</pallas_src>

<mosaic_0001>
module attributes {stable_mosaic.version = 11 : i64} {
  func.func @_spectral_cf_kernel(%arg0: i32, %arg1: memref<2xf32, #tpu.memory_space<smem>>, %arg2: memref<1x128xf32, #tpu.memory_space<vmem>>, %arg3: memref<256x256xf32, #tpu.memory_space<vmem>>, %arg4: memref<256x128xf32, #tpu.memory_space<vmem>>, %arg5: memref<128x256xf32, #tpu.memory_space<vmem>>, %arg6: memref<256x256xf32, #tpu.memory_space<vmem>>) attributes {dimension_semantics = [#tpu.dimension_semantics<parallel>], iteration_bounds = array<i64: 2>, scalar_prefetch = 0 : i64, scratch_operands = 0 : i64, tpu.core_type = #tpu.core_type<tc>, window_params = [{transform_indices = @transform_0, window_bounds = array<i64: 2>}, {pipeline_mode = #tpu.pipeline_mode<synchronous>, transform_indices = @transform_1, window_bounds = array<i64: 1, 128>}, {transform_indices = @transform_2, window_bounds = array<i64: 256, 256>}, {pipeline_mode = #tpu.pipeline_mode<synchronous>, transform_indices = @transform_3, window_bounds = array<i64: 256, 128>}, {pipeline_mode = #tpu.pipeline_mode<synchronous>, transform_indices = @transform_4, window_bounds = array<i64: 128, 256>}, {transform_indices = @transform_5, window_bounds = array<i64: 256, 256>}]} {
    %c0 = arith.constant 0 : index
    %c0_0 = arith.constant 0 : index
    %0 = vector.load %arg3[%c0, %c0_0] : memref<256x256xf32, #tpu.memory_space<vmem>>, vector<256x256xf32>
    %c0_1 = arith.constant 0 : index
    %c0_2 = arith.constant 0 : index
    %1 = vector.load %arg4[%c0_1, %c0_2] : memref<256x128xf32, #tpu.memory_space<vmem>>, vector<256x128xf32>
    %cst = arith.constant dense<0.000000e+00> : vector<256x128xf32>
    %2 = tpu.matmul %0, %1, %cst {dimension_numbers = #tpu.dot_dimension_numbers<[1], [0], [0], [1], [0, 0, 1, 1], [], []>} : vector<256x256xf32>, vector<256x128xf32>, vector<256x128xf32> -> vector<256x128xf32>
    %c0_3 = arith.constant 0 : index
    %c0_4 = arith.constant 0 : index
    %3 = vector.load %arg2[%c0_3, %c0_4] : memref<1x128xf32, #tpu.memory_space<vmem>>, vector<1x128xf32>
    %4 = vector.broadcast %3 : vector<1x128xf32> to vector<256x128xf32>
    %5 = arith.mulf %2, %4 : vector<256x128xf32>
    %c0_5 = arith.constant 0 : index
    %c0_6 = arith.constant 0 : index
    %6 = vector.load %arg5[%c0_5, %c0_6] : memref<128x256xf32, #tpu.memory_space<vmem>>, vector<128x256xf32>
    %cst_7 = arith.constant dense<0.000000e+00> : vector<256x256xf32>
    %7 = tpu.matmul %5, %6, %cst_7 {dimension_numbers = #tpu.dot_dimension_numbers<[1], [0], [0], [1], [0, 0, 1, 1], [], []>} : vector<256x128xf32>, vector<128x256xf32>, vector<256x256xf32> -> vector<256x256xf32>
    %c0_8 = arith.constant 0 : index
    %8 = memref.load %arg1[%c0_8] : memref<2xf32, #tpu.memory_space<smem>>
    %9 = vector.broadcast %8 : f32 to vector<256x256xf32>
    %10 = arith.mulf %9, %0 : vector<256x256xf32>
    %c1 = arith.constant 1 : index
    %11 = memref.load %arg1[%c1] : memref<2xf32, #tpu.memory_space<smem>>
    %12 = vector.broadcast %11 : f32 to vector<256x256xf32>
    %13 = arith.mulf %12, %7 : vector<256x256xf32>
    %14 = arith.addf %10, %13 : vector<256x256xf32>
    %c0_9 = arith.constant 0 : index
    %c0_10 = arith.constant 0 : index
    %15 = vector.load %arg6[%c0_9, %c0_10] : memref<256x256xf32, #tpu.memory_space<vmem>>, vector<256x256xf32>
    tpu.vector_store %arg6[%c0_9, %c0_10], %14 {strides = array<i32>} : memref<256x256xf32, #tpu.memory_space<vmem>>, vector<256x256xf32>,
    return
  }
  func.func @transform_0(%arg0: i32) -> i32 {
    %c0_i32 = arith.constant 0 : i32
    %c0_i32_0 = arith.constant 0 : i32
    return %c0_i32 : i32
  }
  func.func @transform_1(%arg0: i32) -> (i32, i32) {
    %c0_i32 = arith.constant 0 : i32
    %c0_i32_0 = arith.constant 0 : i32
    %c0_i32_1 = arith.constant 0 : i32
    return %c0_i32, %c0_i32_0 : i32, i32
  }
  func.func @transform_2(%arg0: i32) -> (i32, i32) {
    %c0_i32 = arith.constant 0 : i32
    %c0_i32_0 = arith.constant 0 : i32
    return %arg0, %c0_i32 : i32, i32
  }
  func.func @transform_3(%arg0: i32) -> (i32, i32) {
    %c0_i32 = arith.constant 0 : i32
    %c0_i32_0 = arith.constant 0 : i32
    %c0_i32_1 = arith.constant 0 : i32
    return %c0_i32, %c0_i32_0 : i32, i32
  }
  func.func @transform_4(%arg0: i32) -> (i32, i32) {
    %c0_i32 = arith.constant 0 : i32
    %c0_i32_0 = arith.constant 0 : i32
    %c0_i32_1 = arith.constant 0 : i32
    return %c0_i32, %c0_i32_0 : i32, i32
  }
  func.func @transform_5(%arg0: i32) -> (i32, i32) {
    %c0_i32 = arith.constant 0 : i32
    %c0_i32_0 = arith.constant 0 : i32
    return %arg0, %c0_i32 : i32, i32
  }
}

</mosaic_0001>

<llo_original>
// kernel: spectral_cf_forward.1
$region0: #{spectral_cf_forward.1}
  #allocation0 [shape = 'u32[]', space=smem, size = 0x4, offset = 0x4, fixed_abs, tag = 'smem constant byte address 0x4 - core index']
  #allocation1 [shape = 'u32[144,128]{1,0:T(1,128)}', space=vmem, size = 0x12000, scoped, tag = 'internal scratch']
  %s0 = inlined_call_operand.vmem [shape: f32[2], index: 0, kind: input, shape index: {}]
  %s1 = inlined_call_operand.vmem [shape: f32[1,128], index: 1, kind: input, shape index: {}]
  %s2 = inlined_call_operand.hbm [shape: f32[512,256], index: 2, kind: input, shape index: {}]
  %s3 = inlined_call_operand.vmem [shape: f32[256,128], index: 3, kind: input, shape index: {}]
  %s4 = inlined_call_operand.vmem [shape: f32[128,256], index: 4, kind: input, shape index: {}]
  %s5 = inlined_call_operand.hbm [shape: f32[512,256], index: 5, kind: output, shape index: {}]
  %s6 = sld [smem:[#allocation0]]
  $region61: #{spectral_cf_forward.1} parent=0
    _
  %s8 = ssub.s32 1, %s6
  %s9 = scalar_select 0, %s8, %s6
  $region1: #{spectral_cf_forward.1} parent=0
    #allocation2 [shape = 'u8[512]{0}', space=smem, size = 0x200, scoped, tag = 'input window, operand 0, single buffered']
    #allocation3 [shape = 's32[2]{0}', space=sflag, size = 0x8, scoped, tag = 'scoped memory for spectral_cf_forward.1']
    #allocation4 [shape = 's32[2]{0}', space=sflag, size = 0x8, scoped, tag = 'scoped memory for spectral_cf_forward.1']
    #allocation5 [shape = 's32[2]{0}', space=sflag, size = 0x8, scoped, tag = 'scoped memory for spectral_cf_forward.1']
    #allocation6 [shape = 'u8[524288]{0}', space=vmem, size = 0x80000, scoped, tag = 'input window, operand 2']
    #allocation7 [shape = 'u8[524288]{0}', space=vmem, size = 0x80000, scoped, tag = 'output window, operand 0']
    %10 = vsyncpa [#allocation5], 0
    %11 = vsyncpa [#allocation3], 0
    %s12 = scalar_lea.sflag [#allocation3], 1
    %13 = vsyncpa %s12, 0
    %14 = vsyncpa [#allocation4], 0
    %s15 = scalar_lea.sflag [#allocation4], 1
    %16 = vsyncpa %s15, 0
    loop: start=0, step=1, limit=4
    $region2: #{spectral_cf_forward.1} parent=1 // loop_pre_header
      _
    $region3: #{spectral_cf_forward.1} parent=1 // loop_header
      %s18 = sphi 0, %s22
      %p19 = scmp.ge.s32.totalorder %s18, 4
      %s26 = sphi 0, %s26
      %s28 = sphi 0, %s26
      %s29 = sphi 0, %s28
      %s43 = sphi 0, %s29
      %s47 = sphi 0, %s47
      %s49 = sphi 0, %s47
      %s50 = sphi 0, %s49
      %s64 = sphi 0, %s50
      %s70 = sphi 0, %s72
      %s73 = sphi 0, %s70
      %s74 = sphi 0, %s73
      %s90 = sphi 0, %s74
      %s94 = sphi 0, %s94
      %s96 = sphi 0, %s94
      %s97 = sphi 0, %s96
      %s111 = sphi 0, %s97
      %s115 = sphi 0, %s115
      %s117 = sphi 0, %s115
      %s118 = sphi 0, %s117
      %s132 = sphi 0, %s118
      %s138 = sphi 0, %s140
      %s141 = sphi 0, %s138
      %s142 = sphi 0, %s141
      %s158 = sphi 0, %s142
    $region4: #{spectral_cf_forward.1} parent=1 // loop_header_branch
      %21 = sbr.rel (%p19) target = $region8
    $region5: #{spectral_cf_forward.1} parent=1 // loop_body
      %s23 = ssub.s32 %s18, 1
      %s24 = ssub.s32 %s18, 2
      %s25 = sadd.s32 %s18, 1
      %s27 = sadd.s32 %s26, 1
      %p30 = scmp.eq.s32.totalorder %s18, 1
      %p31 = scmp.ne.s32.totalorder %s26, %s28
      %p32 = scmp.eq.s32.totalorder %s18, 0
      %p33 = por %p31, %p32
      %p34 = scmp.ne.s32.totalorder %s26, %s28
      %p35 = scmp.eq.s32.totalorder %s23, 1
      %p36 = por %p34, %p35
      %p37 = scmp.ne.s32.totalorder %s28, %s29
      %p38 = scmp.eq.s32.totalorder %s23, 0
      %p39 = por %p37, %p38
      %p40 = scmp.ne.s32.totalorder %s28, %s29
      %p41 = scmp.eq.s32.totalorder %s24, 1
      %p42 = por %p40, %p41
      %p44 = scmp.ne.s32.totalorder %s29, %s43
      %p45 = scmp.eq.s32.totalorder %s24, 0
      %p46 = por %p44, %p45
      %s48 = sadd.s32 %s47, 1
      %p51 = scmp.eq.s32.totalorder %s18, 1
      %p52 = scmp.ne.s32.totalorder %s47, %s49
      %p53 = scmp.eq.s32.totalorder %s18, 0
      %p54 = por %p52, %p53
      %p55 = scmp.ne.s32.totalorder %s47, %s49
      %p56 = scmp.eq.s32.totalorder %s23, 1
      %p57 = por %p55, %p56
      %p58 = scmp.ne.s32.totalorder %s49, %s50
      %p59 = scmp.eq.s32.totalorder %s23, 0
      %p60 = por %p58, %p59
      %p61 = scmp.ne.s32.totalorder %s49, %s50
      %p62 = scmp.eq.s32.totalorder %s24, 1
      %p63 = por %p61, %p62
      %p65 = scmp.ne.s32.totalorder %s50, %s64
      %p66 = scmp.eq.s32.totalorder %s24, 0
      %p67 = por %p65, %p66
      %s68 = ssub.s32 %s18, %s25
      %p69 = scmp.eq.s32.totalorder %s68, 0
      %s71 = sadd.s32 %s70, 1
      %s72 = scalar_select %p69, %s70, %s71
      %p75 = pneg %p69
      %p76 = scmp.eq.s32.totalorder %s18, 1
      %p77 = por %p75, %p76
      %p78 = scmp.ne.s32.totalorder %s70, %s73
      %p79 = scmp.eq.s32.totalorder %s18, 0
      %p80 = por %p78, %p79
      %p81 = scmp.ne.s32.totalorder %s70, %s73
      %p82 = scmp.eq.s32.totalorder %s23, 1
      %p83 = por %p81, %p82
      %p84 = scmp.ne.s32.totalorder %s73, %s74
      %p85 = scmp.eq.s32.totalorder %s23, 0
      %p86 = por %p84, %p85
      %p87 = scmp.ne.s32.totalorder %s73, %s74
      %p88 = scmp.eq.s32.totalorder %s24, 1
      %p89 = por %p87, %p88
      %p91 = scmp.ne.s32.totalorder %s74, %s90
      %p92 = scmp.eq.s32.totalorder %s24, 0
      %p93 = por %p91, %p92
      %s95 = sadd.s32 %s94, 1
      %p98 = scmp.eq.s32.totalorder %s18, 1
      %p99 = scmp.ne.s32.totalorder %s94, %s96
      %p100 = scmp.eq.s32.totalorder %s18, 0
      %p101 = por %p99, %p100
      %p102 = scmp.ne.s32.totalorder %s94, %s96
      %p103 = scmp.eq.s32.totalorder %s23, 1
      %p104 = por %p102, %p103
      %p105 = scmp.ne.s32.totalorder %s96, %s97
      %p106 = scmp.eq.s32.totalorder %s23, 0
      %p107 = por %p105, %p106
      %p108 = scmp.ne.s32.totalorder %s96, %s97
      %p109 = scmp.eq.s32.totalorder %s24, 1
      %p110 = por %p108, %p109
      %p112 = scmp.ne.s32.totalorder %s97, %s111
      %p113 = scmp.eq.s32.totalorder %s24, 0
      %p114 = por %p112, %p113
      %s116 = sadd.s32 %s115, 1
      %p119 = scmp.eq.s32.totalorder %s18, 1
      %p120 = scmp.ne.s32.totalorder %s115, %s117
      %p121 = scmp.eq.s32.totalorder %s18, 0
      %p122 = por %p120, %p121
      %p123 = scmp.ne.s32.totalorder %s115, %s117
      %p124 = scmp.eq.s32.totalorder %s23, 1
      %p125 = por %p123, %p124
      %p126 = scmp.ne.s32.totalorder %s117, %s118
      %p127 = scmp.eq.s32.totalorder %s23, 0
      %p128 = por %p126, %p127
      %p129 = scmp.ne.s32.totalorder %s117, %s118
      %p130 = scmp.eq.s32.totalorder %s24, 1
      %p131 = por %p129, %p130
      %p133 = scmp.ne.s32.totalorder %s118, %s132
      %p134 = scmp.eq.s32.totalorder %s24, 0
      %p135 = por %p133, %p134
      %s136 = ssub.s32 %s18, %s25
      %p137 = scmp.eq.s32.totalorder %s136, 0
      %s139 = sadd.s32 %s138, 1
      %s140 = scalar_select %p137, %s138, %s139
      %p143 = pneg %p137
      %p144 = scmp.eq.s32.totalorder %s18, 1
      %p145 = por %p143, %p144
      %p146 = scmp.ne.s32.totalorder %s138, %s141
      %p147 = scmp.eq.s32.totalorder %s18, 0
      %p148 = por %p146, %p147
      %p149 = scmp.ne.s32.totalorder %s138, %s141
      %p150 = scmp.eq.s32.totalorder %s23, 1
      %p151 = por %p149, %p150
      %p152 = scmp.ne.s32.totalorder %s141, %s142
      %p153 = scmp.eq.s32.totalorder %s23, 0
      %p154 = por %p152, %p153
      %p155 = scmp.ne.s32.totalorder %s141, %s142
      %p156 = scmp.eq.s32.totalorder %s24, 1
      %p157 = por %p155, %p156
      %p159 = scmp.ne.s32.totalorder %s142, %s158
      %p160 = scmp.eq.s32.totalorder %s24, 0
      %p161 = por %p159, %p160
      %p162 = scmp.le.s32.totalorder 1, %s18
      %p163 = scmp.lt.s32.totalorder %s18, 3
      %p164 = pnand %p162, %p163
      %p165 = pneg %p164
      // Predicated region
      $region9: #{spectral_cf_forward.1} parent=5 // pred_check
        _
      $region10: #{spectral_cf_forward.1} parent=5 // pred_check_branch
        %167 = sbr.rel (%p164) target = $region12
      $region11: #{spectral_cf_forward.1} parent=5 // pred_region
        %s168 = ssub.s32 %s18, 1
        // Predicated region
        $region13: #{spectral_cf_forward.1} parent=11 // pred_check
          %p169 = pneg %p39
        $region14: #{spectral_cf_forward.1} parent=11 // pred_check_branch
          %171 = sbr.rel (%p169) target = $region16
        $region15: #{spectral_cf_forward.1} parent=11 // pred_region
          %s173 = ssub.s32 16, 16
          %174 = vsyncadd [#allocation5], %s173
          %s176 = sshll.u32 %s0, 4
          %s177 = int_to_ptr.vmem [resolvable:$true] %s176
          %179 = dma.vmem_to_smem %s177, 16, [#allocation2], [#allocation5]
        $region16: #{spectral_cf_forward.1} parent=11 // pred_fallthru
          _
        // Predicated region
        $region17: #{spectral_cf_forward.1} parent=11 // pred_check
          %p180 = pneg %p60
        $region18: #{spectral_cf_forward.1} parent=11 // pred_check_branch
          %182 = sbr.rel (%p180) target = $region20
        $region19: #{spectral_cf_forward.1} parent=11 // pred_region
          _
        $region20: #{spectral_cf_forward.1} parent=11 // pred_fallthru
          _
        // Predicated region
        $region21: #{spectral_cf_forward.1} parent=11 // pred_check
          %p183 = pneg %p107
        $region22: #{spectral_cf_forward.1} parent=11 // pred_check_branch
          %185 = sbr.rel (%p183) target = $region24
        $region23: #{spectral_cf_forward.1} parent=11 // pred_region
          _
        $region24: #{spectral_cf_forward.1} parent=11 // pred_fallthru
          _
        // Predicated region
        $region25: #{spectral_cf_forward.1} parent=11 // pred_check
          %p186 = pneg %p128
        $region26: #{spectral_cf_forward.1} parent=11 // pred_check_branch
          %188 = sbr.rel (%p186) target = $region28
        $region27: #{spectral_cf_forward.1} parent=11 // pred_region
          _
        $region28: #{spectral_cf_forward.1} parent=11 // pred_fallthru
          _
      $region12: #{spectral_cf_forward.1} parent=5 // pred_fallthru
        _
      %p189 = scmp.lt.s32.totalorder %s18, 2
      // Predicated region
      $region29: #{spectral_cf_forward.1} parent=5 // pred_check
        %p190 = pneg %p189
      $region30: #{spectral_cf_forward.1} parent=5 // pred_check_branch
        %192 = sbr.rel (%p190) target = $region32
      $region31: #{spectral_cf_forward.1} parent=5 // pred_region
        // Predicated region
        $region33: #{spectral_cf_forward.1} parent=31 // pred_check
          %p193 = pneg %p80
        $region34: #{spectral_cf_forward.1} parent=31 // pred_check_branch
          %195 = sbr.rel (%p193) target = $region36
        $region35: #{spectral_cf_forward.1} parent=31 // pred_region
          %s196 = sand.u32 %s70, 1
          %s197 = scalar_lea.sflag [#allocation3], %s196
          %s198 = sand.u32 %s70, 1
          %s199 = smul.addr %s198, 512
          %s200 = scalar_lea.vmem [#allocation6], %s199
          %s201 = smul.u32 32, %s18
          %s203 = ssub.s32 8192, 8192
          %204 = vsyncadd %s197, %s203
          %s205 = smul.addr %s201, 2
          %s206 = smul.addr %s205, 128
          %s207 = scalar_lea.hbm %s2, %s206
          %s208 = sshll.u32 %s200, 4
          %s209 = int_to_ptr.vmem [resolvable:$true] %s208
          %214 = dma.hbm_to_vmem [thread:$0]  %s207, 8192, %s209, %s197, 256, 256, 16
        $region36: #{spectral_cf_forward.1} parent=31 // pred_fallthru
          _
      $region32: #{spectral_cf_forward.1} parent=5 // pred_fallthru
        _
      %p215 = scmp.le.s32.totalorder 1, %s18
      %p216 = scmp.lt.s32.totalorder %s18, 3
      %p217 = pnand %p215, %p216
      %p218 = pneg %p217
      // Predicated region
      $region37: #{spectral_cf_forward.1} parent=5 // pred_check
        _
      $region38: #{spectral_cf_forward.1} parent=5 // pred_check_branch
        %220 = sbr.rel (%p217) target = $region40
      $region39: #{spectral_cf_forward.1} parent=5 // pred_region
        %s221 = ssub.s32 %s18, 1
        // Predicated region
        $region41: #{spectral_cf_forward.1} parent=39 // pred_check
          %p222 = pneg %p39
        $region42: #{spectral_cf_forward.1} parent=39 // pred_check_branch
          %224 = sbr.rel (%p222) target = $region44
        $region43: #{spectral_cf_forward.1} parent=39 // pred_region
          %225 = dma.done [#allocation5], 16
        $region44: #{spectral_cf_forward.1} parent=39 // pred_fallthru
          _
        %s226 = sand.u32 %s73, 1
        %s227 = scalar_lea.sflag [#allocation3], %s226
        %s228 = sand.u32 %s73, 1
        %s229 = smul.addr %s228, 512
        %s230 = scalar_lea.vmem [#allocation6], %s229
        // Predicated region
        $region45: #{spectral_cf_forward.1} parent=39 // pred_check
          %p231 = pneg %p86
        $region46: #{spectral_cf_forward.1} parent=39 // pred_check_branch
          %233 = sbr.rel (%p231) target = $region48
        $region47: #{spectral_cf_forward.1} parent=39 // pred_region
          %234 = dma.done %s227, 8192
        $region48: #{spectral_cf_forward.1} parent=39 // pred_fallthru
          _
        %235 = sfence
        %p236 = pneg %p39
        %p237 = pneg %p36
        %p238 = pneg %p60
        %p239 = pneg %p57
        %s240 = sand.u32 %s73, 1
        %s241 = scalar_lea.sflag [#allocation3], %s240
        %s242 = sand.u32 %s73, 1
        %s243 = smul.addr %s242, 512
        %s244 = scalar_lea.vmem [#allocation6], %s243
        %p245 = pneg %p86
        %p246 = pneg %p83
        %p247 = pneg %p107
        %p248 = pneg %p104
        %p249 = pneg %p128
        %p250 = pneg %p125
        %p251 = pneg %p154
        %p252 = pneg %p151
        %s253 = sand.u32 %s141, 1
        %s254 = scalar_lea.sflag [#allocation4], %s253
        %s255 = sand.u32 %s141, 1
        %s256 = smul.addr %s255, 512
        %s257 = scalar_lea.vmem [#allocation7], %s256
        %s258 = smul.u32 32, %s23
        %s259 = smul.u32 32, %s23
        %v260 = vld [vmem:[%s230] sm:$0xff]
        %v261 = vld [vmem:[%s230 + $0x8] sm:$0xff]
        %v262 = vld [vmem:[%s230 + $0x10] sm:$0xff]
        %v263 = vld [vmem:[%s230 + $0x18] sm:$0xff]
        %v264 = vld [vmem:[%s230 + $0x20] sm:$0xff]
        %v265 = vld [vmem:[%s230 + $0x28] sm:$0xff]
        %v266 = vld [vmem:[%s230 + $0x30] sm:$0xff]
        %v267 = vld [vmem:[%s230 + $0x38] sm:$0xff]
        %v268 = vld [vmem:[%s230 + $0x40] sm:$0xff]
        %v269 = vld [vmem:[%s230 + $0x48] sm:$0xff]
        %v270 = vld [vmem:[%s230 + $0x50] sm:$0xff]
        %v271 = vld [vmem:[%s230 + $0x58] sm:$0xff]
        %v272 = vld [vmem:[%s230 + $0x60] sm:$0xff]
        %v273 = vld [vmem:[%s230 + $0x68] sm:$0xff]
        %v274 = vld [vmem:[%s230 + $0x70] sm:$0xff]
        %v275 = vld [vmem:[%s230 + $0x78] sm:$0xff]
        %v276 = vld [vmem:[%s230 + $0x80] sm:$0xff]
        %v277 = vld [vmem:[%s230 + $0x88] sm:$0xff]
        %v278 = vld [vmem:[%s230 + $0x90] sm:$0xff]
        %v279 = vld [vmem:[%s230 + $0x98] sm:$0xff]
        %v280 = vld [vmem:[%s230 + $0xa0] sm:$0xff]
        %v281 = vld [vmem:[%s230 + $0xa8] sm:$0xff]
        %v282 = vld [vmem:[%s230 + $0xb0] sm:$0xff]
        %v283 = vld [vmem:[%s230 + $0xb8] sm:$0xff]
        %v284 = vld [vmem:[%s230 + $0xc0] sm:$0xff]
        %v285 = vld [vmem:[%s230 + $0xc8] sm:$0xff]
        %v286 = vld [vmem:[%s230 + $0xd0] sm:$0xff]
        %v287 = vld [vmem:[%s230 + $0xd8] sm:$0xff]
        %v288 = vld [vmem:[%s230 + $0xe0] sm:$0xff]
        %v289 = vld [vmem:[%s230 + $0xe8] sm:$0xff]
        %v290 = vld [vmem:[%s230 + $0xf0] sm:$0xff]
        %v291 = vld [vmem:[%s230 + $0xf8] sm:$0xff]
        %v292 = vld [vmem:[%s230 + $0x100] sm:$0xff]
        %v293 = vld [vmem:[%s230 + $0x108] sm:$0xff]
        %v294 = vld [vmem:[%s230 + $0x110] sm:$0xff]
        %v295 = vld [vmem:[%s230 + $0x118] sm:$0xff]
        %v296 = vld [vmem:[%s230 + $0x120] sm:$0xff]
        %v297 = vld [vmem:[%s230 + $0x128] sm:$0xff]
        %v298 = vld [vmem:[%s230 + $0x130] sm:$0xff]
        %v299 = vld [vmem:[%s230 + $0x138] sm:$0xff]
        %v300 = vld [vmem:[%s230 + $0x140] sm:$0xff]
        %v301 = vld [vmem:[%s230 + $0x148] sm:$0xff]
        %v302 = vld [vmem:[%s230 + $0x150] sm:$0xff]
        %v303 = vld [vmem:[%s230 + $0x158] sm:$0xff]
        %v304 = vld [vmem:[%s230 + $0x160] sm:$0xff]
        %v305 = vld [vmem:[%s230 + $0x168] sm:$0xff]
        %v306 = vld [vmem:[%s230 + $0x170] sm:$0xff]
        %v307 = vld [vmem:[%s230 + $0x178] sm:$0xff]
        %v308 = vld [vmem:[%s230 + $0x180] sm:$0xff]
        %v309 = vld [vmem:[%s230 + $0x188] sm:$0xff]
        %v310 = vld [vmem:[%s230 + $0x190] sm:$0xff]
        %v311 = vld [vmem:[%s230 + $0x198] sm:$0xff]
        %v312 = vld [vmem:[%s230 + $0x1a0] sm:$0xff]
        %v313 = vld [vmem:[%s230 + $0x1a8] sm:$0xff]
        %v314 = vld [vmem:[%s230 + $0x1b0] sm:$0xff]
        %v315 = vld [vmem:[%s230 + $0x1b8] sm:$0xff]
        %v316 = vld [vmem:[%s230 + $0x1c0] sm:$0xff]
        %v317 = vld [vmem:[%s230 + $0x1c8] sm:$0xff]
        %v318 = vld [vmem:[%s230 + $0x1d0] sm:$0xff]
        %v319 = vld [vmem:[%s230 + $0x1d8] sm:$0xff]
        %v320 = vld [vmem:[%s230 + $0x1e0] sm:$0xff]
        %v321 = vld [vmem:[%s230 + $0x1e8] sm:$0xff]
        %v322 = vld [vmem:[%s230 + $0x1f0] sm:$0xff]
        %v323 = vld [vmem:[%s230 + $0x1f8] sm:$0xff]
        %v324 = vld [vmem:[%s3] sm:$0xff]
        %v325 = vld [vmem:[%s3 + $0x8] sm:$0xff]
        %v326 = vld [vmem:[%s3 + $0x10] sm:$0xff]
        %v327 = vld [vmem:[%s3 + $0x18] sm:$0xff]
        %v328 = vld [vmem:[%s3 + $0x20] sm:$0xff]
        %v329 = vld [vmem:[%s3 + $0x28] sm:$0xff]
        %v330 = vld [vmem:[%s3 + $0x30] sm:$0xff]
        %v331 = vld [vmem:[%s3 + $0x38] sm:$0xff]
        %v332 = vld [vmem:[%s3 + $0x40] sm:$0xff]
        %v333 = vld [vmem:[%s3 + $0x48] sm:$0xff]
        %v334 = vld [vmem:[%s3 + $0x50] sm:$0xff]
        %v335 = vld [vmem:[%s3 + $0x58] sm:$0xff]
        %v336 = vld [vmem:[%s3 + $0x60] sm:$0xff]
        %v337 = vld [vmem:[%s3 + $0x68] sm:$0xff]
        %v338 = vld [vmem:[%s3 + $0x70] sm:$0xff]
        %v339 = vld [vmem:[%s3 + $0x78] sm:$0xff]
        %v340 = vld [vmem:[%s3 + $0x80] sm:$0xff]
        %v341 = vld [vmem:[%s3 + $0x88] sm:$0xff]
        %v342 = vld [vmem:[%s3 + $0x90] sm:$0xff]
        %v343 = vld [vmem:[%s3 + $0x98] sm:$0xff]
        %v344 = vld [vmem:[%s3 + $0xa0] sm:$0xff]
        %v345 = vld [vmem:[%s3 + $0xa8] sm:$0xff]
        %v346 = vld [vmem:[%s3 + $0xb0] sm:$0xff]
        %v347 = vld [vmem:[%s3 + $0xb8] sm:$0xff]
        %v348 = vld [vmem:[%s3 + $0xc0] sm:$0xff]
        %v349 = vld [vmem:[%s3 + $0xc8] sm:$0xff]
        %v350 = vld [vmem:[%s3 + $0xd0] sm:$0xff]
        %v351 = vld [vmem:[%s3 + $0xd8] sm:$0xff]
        %v352 = vld [vmem:[%s3 + $0xe0] sm:$0xff]
        %v353 = vld [vmem:[%s3 + $0xe8] sm:$0xff]
        %v354 = vld [vmem:[%s3 + $0xf0] sm:$0xff]
        %v355 = vld [vmem:[%s3 + $0xf8] sm:$0xff]
        %356 = vmatprep.subr.mxu0 0.0
        %357 = vmatpush1.msra.mxu0 %v339
        %358 = vmatprep.subr.mxu0 0.0
        %359 = vmatpush1.msra.mxu0 %v338
        %360 = vmatprep.subr.mxu0 0.0
        %361 = vmatpush1.msra.mxu0 %v337
        %362 = vmatprep.subr.mxu0 0.0
        %363 = vmatpush1.msra.mxu0 %v336
        %364 = vmatprep.subr.mxu0 0.0
        %365 = vmatpush1.msra.mxu0 %v335
        %366 = vmatprep.subr.mxu0 0.0
        %367 = vmatpush1.msra.mxu0 %v334
        %368 = vmatprep.subr.mxu0 0.0
        %369 = vmatpush1.msra.mxu0 %v333
        %370 = vmatprep.subr.mxu0 0.0
        %371 = vmatpush1.msra.mxu0 %v332
        %372 = vmatprep.subr.mxu0 0.0
        %373 = vmatpush1.msra.mxu0 %v331
        %374 = vmatprep.subr.mxu0 0.0
        %375 = vmatpush1.msra.mxu0 %v330
        %376 = vmatprep.subr.mxu0 0.0
        %377 = vmatpush1.msra.mxu0 %v329
        %378 = vmatprep.subr.mxu0 0.0
        %379 = vmatpush1.msra.mxu0 %v328
        %380 = vmatprep.subr.mxu0 0.0
        %381 = vmatpush1.msra.mxu0 %v327
        %382 = vmatprep.subr.mxu0 0.0
        %383 = vmatpush1.msra.mxu0 %v326
        %384 = vmatprep.subr.mxu0 0.0
        %385 = vmatpush1.msra.mxu0 %v325
        %386 = vmatprep.subr.mxu0 0.0
        %387 = vmatpush1.msra.mxu0 %v324
        %388 = vmatprep.subr.mxu0 0.0
        %389 = vmatpush2.msra.mxu0 %v355
        %390 = vmatprep.subr.mxu0 0.0
        %391 = vmatpush2.msra.mxu0 %v354
        %392 = vmatprep.subr.mxu0 0.0
        %393 = vmatpush2.msra.mxu0 %v353
        %394 = vmatprep.subr.mxu0 0.0
        %395 = vmatpush2.msra.mxu0 %v352
        %396 = vmatprep.subr.mxu0 0.0
        %397 = vmatpush2.msra.mxu0 %v351
        %398 = vmatprep.subr.mxu0 0.0
        %399 = vmatpush2.msra.mxu0 %v350
        %400 = vmatprep.subr.mxu0 0.0
        %401 = vmatpush2.msra.mxu0 %v349
        %402 = vmatprep.subr.mxu0 0.0
        %403 = vmatpush2.msra.mxu0 %v348
        %404 = vmatprep.subr.mxu0 0.0
        %405 = vmatpush2.msra.mxu0 %v347
        %406 = vmatprep.subr.mxu0 0.0
        %407 = vmatpush2.msra.mxu0 %v346
        %408 = vmatprep.subr.mxu0 0.0
        %409 = vmatpush2.msra.mxu0 %v345
        %410 = vmatprep.subr.mxu0 0.0
        %411 = vmatpush2.msra.mxu0 %v344
        %412 = vmatprep.subr.mxu0 0.0
        %413 = vmatpush2.msra.mxu0 %v343
        %414 = vmatprep.subr.mxu0 0.0
        %415 = vmatpush2.msra.mxu0 %v342
        %416 = vmatprep.subr.mxu0 0.0
        %417 = vmatpush2.msra.mxu0 %v341
        %418 = vmatprep.subr.mxu0 0.0
        %419 = vmatpush2.msra.mxu0 %v340
        %420 = vmatprep.mubr.f32.mxu0 %v261
        %421 = vmatmul.mubr.f32.gmra.mxu0 %v260
        %v422 = vpop.f32.mrf.mxu0
        %v423 = vadd.f32 0.0, %v422
        %v424 = vpop.f32.mrf.mxu0
        %425 = vmatprep.mubr.f32.mxu0 %v263
        %426 = vmatmul.mubr.f32.gmra.mxu0 %v262
        %v427 = vpop.f32.mrf.mxu0
        %v428 = vadd.f32 0.0, %v427
        %v429 = vpop.f32.mrf.mxu0
        %430 = vmatprep.mubr.f32.mxu0 %v265
        %431 = vmatmul.mubr.f32.gmra.mxu0 %v264
        %v432 = vpop.f32.mrf.mxu0
        %v433 = vadd.f32 0.0, %v432
        %v434 = vpop.f32.mrf.mxu0
        %435 = vmatprep.mubr.f32.mxu0 %v267
        %436 = vmatmul.mubr.f32.gmra.mxu0 %v266
        %v437 = vpop.f32.mrf.mxu0
        %v438 = vadd.f32 0.0, %v437
        %v439 = vpop.f32.mrf.mxu0
        %440 = vmatprep.mubr.f32.mxu0 %v269
        %441 = vmatmul.mubr.f32.gmra.mxu0 %v268
        %v442 = vpop.f32.mrf.mxu0
        %v443 = vadd.f32 0.0, %v442
        %v444 = vpop.f32.mrf.mxu0
        %445 = vmatprep.mubr.f32.mxu0 %v271
        %446 = vmatmul.mubr.f32.gmra.mxu0 %v270
        %v447 = vpop.f32.mrf.mxu0
        %v448 = vadd.f32 0.0, %v447
        %v449 = vpop.f32.mrf.mxu0
        %450 = vmatprep.mubr.f32.mxu0 %v273
        %451 = vmatmul.mubr.f32.gmra.mxu0 %v272
        %v452 = vpop.f32.mrf.mxu0
        %v453 = vadd.f32 0.0, %v452
        %v454 = vpop.f32.mrf.mxu0
        %455 = vmatprep.mubr.f32.mxu0 %v275
        %456 = vmatmul.mubr.f32.gmra.mxu0 %v274
        %v457 = vpop.f32.mrf.mxu0
        %v458 = vadd.f32 0.0, %v457
        %v459 = vpop.f32.mrf.mxu0
        %460 = vmatprep.mubr.f32.mxu0 %v277
        %461 = vmatmul.mubr.f32.gmra.mxu0 %v276
        %v462 = vpop.f32.mrf.mxu0
        %v463 = vadd.f32 0.0, %v462
        %v464 = vpop.f32.mrf.mxu0
        %465 = vmatprep.mubr.f32.mxu0 %v279
        %466 = vmatmul.mubr.f32.gmra.mxu0 %v278
        %v467 = vpop.f32.mrf.mxu0
        %v468 = vadd.f32 0.0, %v467
        %v469 = vpop.f32.mrf.mxu0
        %470 = vmatprep.mubr.f32.mxu0 %v281
        %471 = vmatmul.mubr.f32.gmra.mxu0 %v280
        %v472 = vpop.f32.mrf.mxu0
        %v473 = vadd.f32 0.0, %v472
        %v474 = vpop.f32.mrf.mxu0
        %475 = vmatprep.mubr.f32.mxu0 %v283
        %476 = vmatmul.mubr.f32.gmra.mxu0 %v282
        %v477 = vpop.f32.mrf.mxu0
        %v478 = vadd.f32 0.0, %v477
        %v479 = vpop.f32.mrf.mxu0
        %480 = vmatprep.mubr.f32.mxu0 %v285
        %481 = vmatmul.mubr.f32.gmra.mxu0 %v284
        %v482 = vpop.f32.mrf.mxu0
        %v483 = vadd.f32 0.0, %v482
        %v484 = vpop.f32.mrf.mxu0
        %485 = vmatprep.mubr.f32.mxu0 %v287
        %486 = vmatmul.mubr.f32.gmra.mxu0 %v286
        %v487 = vpop.f32.mrf.mxu0
        %v488 = vadd.f32 0.0, %v487
        %v489 = vpop.f32.mrf.mxu0
        %490 = vmatprep.mubr.f32.mxu0 %v289
        %491 = vmatmul.mubr.f32.gmra.mxu0 %v288
        %v492 = vpop.f32.mrf.mxu0
        %v493 = vadd.f32 0.0, %v492
        %v494 = vpop.f32.mrf.mxu0
        %495 = vmatprep.mubr.f32.mxu0 %v291
        %496 = vmatmul.mubr.f32.gmra.mxu0 %v290
        %v497 = vpop.f32.mrf.mxu0
        %v498 = vadd.f32 0.0, %v497
        %v499 = vpop.f32.mrf.mxu0
        %500 = vmatprep.mubr.f32.mxu0 %v293
        %501 = vmatmul.mubr.f32.gmra.mxu0 %v292
        %v502 = vpop.f32.mrf.mxu0
        %v503 = vadd.f32 0.0, %v502
        %v504 = vpop.f32.mrf.mxu0
        %505 = vmatprep.mubr.f32.mxu0 %v295
        %506 = vmatmul.mubr.f32.gmra.mxu0 %v294
        %v507 = vpop.f32.mrf.mxu0
        %v508 = vadd.f32 0.0, %v507
        %v509 = vpop.f32.mrf.mxu0
        %510 = vmatprep.mubr.f32.mxu0 %v297
        %511 = vmatmul.mubr.f32.gmra.mxu0 %v296
        %v512 = vpop.f32.mrf.mxu0
        %v513 = vadd.f32 0.0, %v512
        %v514 = vpop.f32.mrf.mxu0
        %515 = vmatprep.mubr.f32.mxu0 %v299
        %516 = vmatmul.mubr.f32.gmra.mxu0 %v298
        %v517 = vpop.f32.mrf.mxu0
        %v518 = vadd.f32 0.0, %v517
        %v519 = vpop.f32.mrf.mxu0
        %520 = vmatprep.mubr.f32.mxu0 %v301
        %521 = vmatmul.mubr.f32.gmra.mxu0 %v300
        %v522 = vpop.f32.mrf.mxu0
        %v523 = vadd.f32 0.0, %v522
        %v524 = vpop.f32.mrf.mxu0
        %525 = vmatprep.mubr.f32.mxu0 %v303
        %526 = vmatmul.mubr.f32.gmra.mxu0 %v302
        %v527 = vpop.f32.mrf.mxu0
        %v528 = vadd.f32 0.0, %v527
        %v529 = vpop.f32.mrf.mxu0
        %530 = vmatprep.mubr.f32.mxu0 %v305
        %531 = vmatmul.mubr.f32.gmra.mxu0 %v304
        %v532 = vpop.f32.mrf.mxu0
        %v533 = vadd.f32 0.0, %v532
        %v534 = vpop.f32.mrf.mxu0
        %535 = vmatprep.mubr.f32.mxu0 %v307
        %536 = vmatmul.mubr.f32.gmra.mxu0 %v306
        %v537 = vpop.f32.mrf.mxu0
        %v538 = vadd.f32 0.0, %v537
        %v539 = vpop.f32.mrf.mxu0
        %540 = vmatprep.mubr.f32.mxu0 %v309
        %541 = vmatmul.mubr.f32.gmra.mxu0 %v308
        %v542 = vpop.f32.mrf.mxu0
        %v543 = vadd.f32 0.0, %v542
        %v544 = vpop.f32.mrf.mxu0
        %545 = vmatprep.mubr.f32.mxu0 %v311
        %546 = vmatmul.mubr.f32.gmra.mxu0 %v310
        %v547 = vpop.f32.mrf.mxu0
        %v548 = vadd.f32 0.0, %v547
        %v549 = vpop.f32.mrf.mxu0
        %550 = vmatprep.mubr.f32.mxu0 %v313
        %551 = vmatmul.mubr.f32.gmra.mxu0 %v312
        %v552 = vpop.f32.mrf.mxu0
        %v553 = vadd.f32 0.0, %v552
        %v554 = vpop.f32.mrf.mxu0
        %555 = vmatprep.mubr.f32.mxu0 %v315
        %556 = vmatmul.mubr.f32.gmra.mxu0 %v314
        %v557 = vpop.f32.mrf.mxu0
        %v558 = vadd.f32 0.0, %v557
        %v559 = vpop.f32.mrf.mxu0
        %560 = vmatprep.mubr.f32.mxu0 %v317
        %561 = vmatmul.mubr.f32.gmra.mxu0 %v316
        %v562 = vpop.f32.mrf.mxu0
        %v563 = vadd.f32 0.0, %v562
        %v564 = vpop.f32.mrf.mxu0
        %565 = vmatprep.mubr.f32.mxu0 %v319
        %566 = vmatmul.mubr.f32.gmra.mxu0 %v318
        %v567 = vpop.f32.mrf.mxu0
        %v568 = vadd.f32 0.0, %v567
        %v569 = vpop.f32.mrf.mxu0
        %570 = vmatprep.mubr.f32.mxu0 %v321
        %571 = vmatmul.mubr.f32.gmra.mxu0 %v320
        %v572 = vpop.f32.mrf.mxu0
        %v573 = vadd.f32 0.0, %v572
        %v574 = vpop.f32.mrf.mxu0
        %575 = vmatprep.mubr.f32.mxu0 %v323
        %576 = vmatmul.mubr.f32.gmra.mxu0 %v322
        %v577 = vpop.f32.mrf.mxu0
        %v578 = vadd.f32 0.0, %v577
        %v579 = vpop.f32.mrf.mxu0
        %580 = vdwg.mxu0
        %v581 = vld [vmem:[%s1] sm:$0x1]
        %v583 = vlaneseq
        %v584 = vshrl.u32 %v583, 7
        %v585 = vsub.s32 0, %v584
        %v586 = vrot.slane %v581, %v585
        %v588 = vmul.f32 %v423, %v586
        %v589 = vmul.f32 %v428, %v586
        %v590 = vmul.f32 %v433, %v586
        %v591 = vmul.f32 %v438, %v586
        %v592 = vmul.f32 %v443, %v586
        %v593 = vmul.f32 %v448, %v586
        %v594 = vmul.f32 %v453, %v586
        %v595 = vmul.f32 %v458, %v586
        %v596 = vmul.f32 %v463, %v586
        %v597 = vmul.f32 %v468, %v586
        %v598 = vmul.f32 %v473, %v586
        %v599 = vmul.f32 %v478, %v586
        %v600 = vmul.f32 %v483, %v586
        %v601 = vmul.f32 %v488, %v586
        %v602 = vmul.f32 %v493, %v586
        %v603 = vmul.f32 %v498, %v586
        %v604 = vmul.f32 %v503, %v586
        %v605 = vmul.f32 %v508, %v586
        %v606 = vmul.f32 %v513, %v586
        %v607 = vmul.f32 %v518, %v586
        %v608 = vmul.f32 %v523, %v586
        %v609 = vmul.f32 %v528, %v586
        %v610 = vmul.f32 %v533, %v586
        %v611 = vmul.f32 %v538, %v586
        %v612 = vmul.f32 %v543, %v586
        %v613 = vmul.f32 %v548, %v586
        %v614 = vmul.f32 %v553, %v586
        %v615 = vmul.f32 %v558, %v586
        %v616 = vmul.f32 %v563, %v586
        %v617 = vmul.f32 %v568, %v586
        %v618 = vmul.f32 %v573, %v586
        %v619 = vmul.f32 %v578, %v586
        %v620 = vld [vmem:[%s4] sm:$0xff]
        %v621 = vld [vmem:[%s4 + $0x8] sm:$0xff]
        %v622 = vld [vmem:[%s4 + $0x10] sm:$0xff]
        %v623 = vld [vmem:[%s4 + $0x18] sm:$0xff]
        %v624 = vld [vmem:[%s4 + $0x20] sm:$0xff]
        %v625 = vld [vmem:[%s4 + $0x28] sm:$0xff]
        %v626 = vld [vmem:[%s4 + $0x30] sm:$0xff]
        %v627 = vld [vmem:[%s4 + $0x38] sm:$0xff]
        %v628 = vld [vmem:[%s4 + $0x40] sm:$0xff]
        %v629 = vld [vmem:[%s4 + $0x48] sm:$0xff]
        %v630 = vld [vmem:[%s4 + $0x50] sm:$0xff]
        %v631 = vld [vmem:[%s4 + $0x58] sm:$0xff]
        %v632 = vld [vmem:[%s4 + $0x60] sm:$0xff]
        %v633 = vld [vmem:[%s4 + $0x68] sm:$0xff]
        %v634 = vld [vmem:[%s4 + $0x70] sm:$0xff]
        %v635 = vld [vmem:[%s4 + $0x78] sm:$0xff]
        %v636 = vld [vmem:[%s4 + $0x80] sm:$0xff]
        %v637 = vld [vmem:[%s4 + $0x88] sm:$0xff]
        %v638 = vld [vmem:[%s4 + $0x90] sm:$0xff]
        %v639 = vld [vmem:[%s4 + $0x98] sm:$0xff]
        %v640 = vld [vmem:[%s4 + $0xa0] sm:$0xff]
        %v641 = vld [vmem:[%s4 + $0xa8] sm:$0xff]
        %v642 = vld [vmem:[%s4 + $0xb0] sm:$0xff]
        %v643 = vld [vmem:[%s4 + $0xb8] sm:$0xff]
        %v644 = vld [vmem:[%s4 + $0xc0] sm:$0xff]
        %v645 = vld [vmem:[%s4 + $0xc8] sm:$0xff]
        %v646 = vld [vmem:[%s4 + $0xd0] sm:$0xff]
        %v647 = vld [vmem:[%s4 + $0xd8] sm:$0xff]
        %v648 = vld [vmem:[%s4 + $0xe0] sm:$0xff]
        %v649 = vld [vmem:[%s4 + $0xe8] sm:$0xff]
        %v650 = vld [vmem:[%s4 + $0xf0] sm:$0xff]
        %v651 = vld [vmem:[%s4 + $0xf8] sm:$0xff]
        %652 = vmatprep.subr.mxu0 %v651
        %653 = vmatpush1.msra.mxu0 %v650
        %654 = vmatprep.subr.mxu0 %v649
        %655 = vmatpush1.msra.mxu0 %v648
        %656 = vmatprep.subr.mxu0 %v647
        %657 = vmatpush1.msra.mxu0 %v646
        %658 = vmatprep.subr.mxu0 %v645
        %659 = vmatpush1.msra.mxu0 %v644
        %660 = vmatprep.subr.mxu0 %v643
        %661 = vmatpush1.msra.mxu0 %v642
        %662 = vmatprep.subr.mxu0 %v641
        %663 = vmatpush1.msra.mxu0 %v640
        %664 = vmatprep.subr.mxu0 %v639
        %665 = vmatpush1.msra.mxu0 %v638
        %666 = vmatprep.subr.mxu0 %v637
        %667 = vmatpush1.msra.mxu0 %v636
        %668 = vmatprep.subr.mxu0 %v635
        %669 = vmatpush1.msra.mxu0 %v634
        %670 = vmatprep.subr.mxu0 %v633
        %671 = vmatpush1.msra.mxu0 %v632
        %672 = vmatprep.subr.mxu0 %v631
        %673 = vmatpush1.msra.mxu0 %v630
        %674 = vmatprep.subr.mxu0 %v629
        %675 = vmatpush1.msra.mxu0 %v628
        %676 = vmatprep.subr.mxu0 %v627
        %677 = vmatpush1.msra.mxu0 %v626
        %678 = vmatprep.subr.mxu0 %v625
        %679 = vmatpush1.msra.mxu0 %v624
        %680 = vmatprep.subr.mxu0 %v623
        %681 = vmatpush1.msra.mxu0 %v622
        %682 = vmatprep.subr.mxu0 %v621
        %683 = vmatpush1.msra.mxu0 %v620
        %684 = vmatprep.subr.mxu0 0.0
        %685 = vmatpush2.msra.mxu0 0.0
        %686 = vmatprep.subr.mxu0 0.0
        %687 = vmatpush2.msra.mxu0 0.0
        %688 = vmatprep.subr.mxu0 0.0
        %689 = vmatpush2.msra.mxu0 0.0
        %690 = vmatprep.subr.mxu0 0.0
        %691 = vmatpush2.msra.mxu0 0.0
        %692 = vmatprep.subr.mxu0 0.0
        %693 = vmatpush2.msra.mxu0 0.0
        %694 = vmatprep.subr.mxu0 0.0
        %695 = vmatpush2.msra.mxu0 0.0
        %696 = vmatprep.subr.mxu0 0.0
        %697 = vmatpush2.msra.mxu0 0.0
        %698 = vmatprep.subr.mxu0 0.0
        %699 = vmatpush2.msra.mxu0 0.0
        %700 = vmatprep.subr.mxu0 0.0
        %701 = vmatpush2.msra.mxu0 0.0
        %702 = vmatprep.subr.mxu0 0.0
        %703 = vmatpush2.msra.mxu0 0.0
        %704 = vmatprep.subr.mxu0 0.0
        %705 = vmatpush2.msra.mxu0 0.0
        %706 = vmatprep.subr.mxu0 0.0
        %707 = vmatpush2.msra.mxu0 0.0
        %708 = vmatprep.subr.mxu0 0.0
        %709 = vmatpush2.msra.mxu0 0.0
        %710 = vmatprep.subr.mxu0 0.0
        %711 = vmatpush2.msra.mxu0 0.0
        %712 = vmatprep.subr.mxu0 0.0
        %713 = vmatpush2.msra.mxu0 0.0
        %714 = vmatprep.subr.mxu0 0.0
        %715 = vmatpush2.msra.mxu0 0.0
        %716 = vmatprep.mubr.f32.mxu0 0.0
        %717 = vmatmul.mubr.f32.gmra.mxu0 %v588
        %v718 = vpop.f32.mrf.mxu0
        %v719 = vadd.f32 0.0, %v718
        %v720 = vpop.f32.mrf.mxu0
        %v721 = vadd.f32 0.0, %v720
        %722 = vmatprep.mubr.f32.mxu0 0.0
        %723 = vmatmul.mubr.f32.gmra.mxu0 %v589
        %v724 = vpop.f32.mrf.mxu0
        %v725 = vadd.f32 0.0, %v724
        %v726 = vpop.f32.mrf.mxu0
        %v727 = vadd.f32 0.0, %v726
        %728 = vmatprep.mubr.f32.mxu0 0.0
        %729 = vmatmul.mubr.f32.gmra.mxu0 %v590
        %v730 = vpop.f32.mrf.mxu0
        %v731 = vadd.f32 0.0, %v730
        %v732 = vpop.f32.mrf.mxu0
        %v733 = vadd.f32 0.0, %v732
        %734 = vmatprep.mubr.f32.mxu0 0.0
        %735 = vmatmul.mubr.f32.gmra.mxu0 %v591
        %v736 = vpop.f32.mrf.mxu0
        %v737 = vadd.f32 0.0, %v736
        %v738 = vpop.f32.mrf.mxu0
        %v739 = vadd.f32 0.0, %v738
        %740 = vmatprep.mubr.f32.mxu0 0.0
        %741 = vmatmul.mubr.f32.gmra.mxu0 %v592
        %v742 = vpop.f32.mrf.mxu0
        %v743 = vadd.f32 0.0, %v742
        %v744 = vpop.f32.mrf.mxu0
        %v745 = vadd.f32 0.0, %v744
        %746 = vmatprep.mubr.f32.mxu0 0.0
        %747 = vmatmul.mubr.f32.gmra.mxu0 %v593
        %v748 = vpop.f32.mrf.mxu0
        %v749 = vadd.f32 0.0, %v748
        %v750 = vpop.f32.mrf.mxu0
        %v751 = vadd.f32 0.0, %v750
        %752 = vmatprep.mubr.f32.mxu0 0.0
        %753 = vmatmul.mubr.f32.gmra.mxu0 %v594
        %v754 = vpop.f32.mrf.mxu0
        %v755 = vadd.f32 0.0, %v754
        %v756 = vpop.f32.mrf.mxu0
        %v757 = vadd.f32 0.0, %v756
        %758 = vmatprep.mubr.f32.mxu0 0.0
        %759 = vmatmul.mubr.f32.gmra.mxu0 %v595
        %v760 = vpop.f32.mrf.mxu0
        %v761 = vadd.f32 0.0, %v760
        %v762 = vpop.f32.mrf.mxu0
        %v763 = vadd.f32 0.0, %v762
        %764 = vmatprep.mubr.f32.mxu0 0.0
        %765 = vmatmul.mubr.f32.gmra.mxu0 %v596
        %v766 = vpop.f32.mrf.mxu0
        %v767 = vadd.f32 0.0, %v766
        %v768 = vpop.f32.mrf.mxu0
        %v769 = vadd.f32 0.0, %v768
        %770 = vmatprep.mubr.f32.mxu0 0.0
        %771 = vmatmul.mubr.f32.gmra.mxu0 %v597
        %v772 = vpop.f32.mrf.mxu0
        %v773 = vadd.f32 0.0, %v772
        %v774 = vpop.f32.mrf.mxu0
        %v775 = vadd.f32 0.0, %v774
        %776 = vmatprep.mubr.f32.mxu0 0.0
        %777 = vmatmul.mubr.f32.gmra.mxu0 %v598
        %v778 = vpop.f32.mrf.mxu0
        %v779 = vadd.f32 0.0, %v778
        %v780 = vpop.f32.mrf.mxu0
        %v781 = vadd.f32 0.0, %v780
        %782 = vmatprep.mubr.f32.mxu0 0.0
        %783 = vmatmul.mubr.f32.gmra.mxu0 %v599
        %v784 = vpop.f32.mrf.mxu0
        %v785 = vadd.f32 0.0, %v784
        %v786 = vpop.f32.mrf.mxu0
        %v787 = vadd.f32 0.0, %v786
        %788 = vmatprep.mubr.f32.mxu0 0.0
        %789 = vmatmul.mubr.f32.gmra.mxu0 %v600
        %v790 = vpop.f32.mrf.mxu0
        %v791 = vadd.f32 0.0, %v790
        %v792 = vpop.f32.mrf.mxu0
        %v793 = vadd.f32 0.0, %v792
        %794 = vmatprep.mubr.f32.mxu0 0.0
        %795 = vmatmul.mubr.f32.gmra.mxu0 %v601
        %v796 = vpop.f32.mrf.mxu0
        %v797 = vadd.f32 0.0, %v796
        %v798 = vpop.f32.mrf.mxu0
        %v799 = vadd.f32 0.0, %v798
        %800 = vmatprep.mubr.f32.mxu0 0.0
        %801 = vmatmul.mubr.f32.gmra.mxu0 %v602
        %v802 = vpop.f32.mrf.mxu0
        %v803 = vadd.f32 0.0, %v802
        %v804 = vpop.f32.mrf.mxu0
        %v805 = vadd.f32 0.0, %v804
        %806 = vmatprep.mubr.f32.mxu0 0.0
        %807 = vmatmul.mubr.f32.gmra.mxu0 %v603
        %v808 = vpop.f32.mrf.mxu0
        %v809 = vadd.f32 0.0, %v808
        %v810 = vpop.f32.mrf.mxu0
        %v811 = vadd.f32 0.0, %v810
        %812 = vmatprep.mubr.f32.mxu0 0.0
        %813 = vmatmul.mubr.f32.gmra.mxu0 %v604
        %v814 = vpop.f32.mrf.mxu0
        %v815 = vadd.f32 0.0, %v814
        %v816 = vpop.f32.mrf.mxu0
        %v817 = vadd.f32 0.0, %v816
        %818 = vmatprep.mubr.f32.mxu0 0.0
        %819 = vmatmul.mubr.f32.gmra.mxu0 %v605
        %v820 = vpop.f32.mrf.mxu0
        %v821 = vadd.f32 0.0, %v820
        %v822 = vpop.f32.mrf.mxu0
        %v823 = vadd.f32 0.0, %v822
        %824 = vmatprep.mubr.f32.mxu0 0.0
        %825 = vmatmul.mubr.f32.gmra.mxu0 %v606
        %v826 = vpop.f32.mrf.mxu0
        %v827 = vadd.f32 0.0, %v826
        %v828 = vpop.f32.mrf.mxu0
        %v829 = vadd.f32 0.0, %v828
        %830 = vmatprep.mubr.f32.mxu0 0.0
        %831 = vmatmul.mubr.f32.gmra.mxu0 %v607
        %v832 = vpop.f32.mrf.mxu0
        %v833 = vadd.f32 0.0, %v832
        %v834 = vpop.f32.mrf.mxu0
        %v835 = vadd.f32 0.0, %v834
        %836 = vmatprep.mubr.f32.mxu0 0.0
        %837 = vmatmul.mubr.f32.gmra.mxu0 %v608
        %v838 = vpop.f32.mrf.mxu0
        %v839 = vadd.f32 0.0, %v838
        %v840 = vpop.f32.mrf.mxu0
        %v841 = vadd.f32 0.0, %v840
        %842 = vmatprep.mubr.f32.mxu0 0.0
        %843 = vmatmul.mubr.f32.gmra.mxu0 %v609
        %v844 = vpop.f32.mrf.mxu0
        %v845 = vadd.f32 0.0, %v844
        %v846 = vpop.f32.mrf.mxu0
        %v847 = vadd.f32 0.0, %v846
        %848 = vmatprep.mubr.f32.mxu0 0.0
        %849 = vmatmul.mubr.f32.gmra.mxu0 %v610
        %v850 = vpop.f32.mrf.mxu0
        %v851 = vadd.f32 0.0, %v850
        %v852 = vpop.f32.mrf.mxu0
        %v853 = vadd.f32 0.0, %v852
        %854 = vmatprep.mubr.f32.mxu0 0.0
        %855 = vmatmul.mubr.f32.gmra.mxu0 %v611
        %v856 = vpop.f32.mrf.mxu0
        %v857 = vadd.f32 0.0, %v856
        %v858 = vpop.f32.mrf.mxu0
        %v859 = vadd.f32 0.0, %v858
        %860 = vmatprep.mubr.f32.mxu0 0.0
        %861 = vmatmul.mubr.f32.gmra.mxu0 %v612
        %v862 = vpop.f32.mrf.mxu0
        %v863 = vadd.f32 0.0, %v862
        %v864 = vpop.f32.mrf.mxu0
        %v865 = vadd.f32 0.0, %v864
        %866 = vmatprep.mubr.f32.mxu0 0.0
        %867 = vmatmul.mubr.f32.gmra.mxu0 %v613
        %v868 = vpop.f32.mrf.mxu0
        %v869 = vadd.f32 0.0, %v868
        %v870 = vpop.f32.mrf.mxu0
        %v871 = vadd.f32 0.0, %v870
        %872 = vmatprep.mubr.f32.mxu0 0.0
        %873 = vmatmul.mubr.f32.gmra.mxu0 %v614
        %v874 = vpop.f32.mrf.mxu0
        %v875 = vadd.f32 0.0, %v874
        %v876 = vpop.f32.mrf.mxu0
        %v877 = vadd.f32 0.0, %v876
        %878 = vmatprep.mubr.f32.mxu0 0.0
        %879 = vmatmul.mubr.f32.gmra.mxu0 %v615
        %v880 = vpop.f32.mrf.mxu0
        %v881 = vadd.f32 0.0, %v880
        %v882 = vpop.f32.mrf.mxu0
        %v883 = vadd.f32 0.0, %v882
        %884 = vmatprep.mubr.f32.mxu0 0.0
        %885 = vmatmul.mubr.f32.gmra.mxu0 %v616
        %v886 = vpop.f32.mrf.mxu0
        %v887 = vadd.f32 0.0, %v886
        %v888 = vpop.f32.mrf.mxu0
        %v889 = vadd.f32 0.0, %v888
        %890 = vmatprep.mubr.f32.mxu0 0.0
        %891 = vmatmul.mubr.f32.gmra.mxu0 %v617
        %v892 = vpop.f32.mrf.mxu0
        %v893 = vadd.f32 0.0, %v892
        %v894 = vpop.f32.mrf.mxu0
        %v895 = vadd.f32 0.0, %v894
        %896 = vmatprep.mubr.f32.mxu0 0.0
        %897 = vmatmul.mubr.f32.gmra.mxu0 %v618
        %v898 = vpop.f32.mrf.mxu0
        %v899 = vadd.f32 0.0, %v898
        %v900 = vpop.f32.mrf.mxu0
        %v901 = vadd.f32 0.0, %v900
        %902 = vmatprep.mubr.f32.mxu0 0.0
        %903 = vmatmul.mubr.f32.gmra.mxu0 %v619
        %v904 = vpop.f32.mrf.mxu0
        %v905 = vadd.f32 0.0, %v904
        %v906 = vpop.f32.mrf.mxu0
        %v907 = vadd.f32 0.0, %v906
        %908 = vdwg.mxu0
        %s909 = sld [smem:[#allocation2]]
        %v910 = vstv %s909
        %v911 = vmul.f32 %v910, %v260
        %v912 = vmul.f32 %v910, %v261
        %v913 = vmul.f32 %v910, %v262
        %v914 = vmul.f32 %v910, %v263
        %v915 = vmul.f32 %v910, %v264
        %v916 = vmul.f32 %v910, %v265
        %v917 = vmul.f32 %v910, %v266
        %v918 = vmul.f32 %v910, %v267
        %v919 = vmul.f32 %v910, %v268
        %v920 = vmul.f32 %v910, %v269
        %v921 = vmul.f32 %v910, %v270
        %v922 = vmul.f32 %v910, %v271
        %v923 = vmul.f32 %v910, %v272
        %v924 = vmul.f32 %v910, %v273
        %v925 = vmul.f32 %v910, %v274
        %v926 = vmul.f32 %v910, %v275
        %v927 = vmul.f32 %v910, %v276
        %v928 = vmul.f32 %v910, %v277
        %v929 = vmul.f32 %v910, %v278
        %v930 = vmul.f32 %v910, %v279
        %v931 = vmul.f32 %v910, %v280
        %v932 = vmul.f32 %v910, %v281
        %v933 = vmul.f32 %v910, %v282
        %v934 = vmul.f32 %v910, %v283
        %v935 = vmul.f32 %v910, %v284
        %v936 = vmul.f32 %v910, %v285
        %v937 = vmul.f32 %v910, %v286
        %v938 = vmul.f32 %v910, %v287
        %v939 = vmul.f32 %v910, %v288
        %v940 = vmul.f32 %v910, %v289
        %v941 = vmul.f32 %v910, %v290
        %v942 = vmul.f32 %v910, %v291
        %v943 = vmul.f32 %v910, %v292
        %v944 = vmul.f32 %v910, %v293
        %v945 = vmul.f32 %v910, %v294
        %v946 = vmul.f32 %v910, %v295
        %v947 = vmul.f32 %v910, %v296
        %v948 = vmul.f32 %v910, %v297
        %v949 = vmul.f32 %v910, %v298
        %v950 = vmul.f32 %v910, %v299
        %v951 = vmul.f32 %v910, %v300
        %v952 = vmul.f32 %v910, %v301
        %v953 = vmul.f32 %v910, %v302
        %v954 = vmul.f32 %v910, %v303
        %v955 = vmul.f32 %v910, %v304
        %v956 = vmul.f32 %v910, %v305
        %v957 = vmul.f32 %v910, %v306
        %v958 = vmul.f32 %v910, %v307
        %v959 = vmul.f32 %v910, %v308
        %v960 = vmul.f32 %v910, %v309
        %v961 = vmul.f32 %v910, %v310
        %v962 = vmul.f32 %v910, %v311
        %v963 = vmul.f32 %v910, %v312
        %v964 = vmul.f32 %v910, %v313
        %v965 = vmul.f32 %v910, %v314
        %v966 = vmul.f32 %v910, %v315
        %v967 = vmul.f32 %v910, %v316
        %v968 = vmul.f32 %v910, %v317
        %v969 = vmul.f32 %v910, %v318
        %v970 = vmul.f32 %v910, %v319
        %v971 = vmul.f32 %v910, %v320
        %v972 = vmul.f32 %v910, %v321
        %v973 = vmul.f32 %v910, %v322
        %v974 = vmul.f32 %v910, %v323
        %s975 = sld [smem:[#allocation2 + $0x1]]
        %v976 = vstv %s975
        %v977 = vmul.f32 %v976, %v719
        %v978 = vmul.f32 %v976, %v721
        %v979 = vmul.f32 %v976, %v725
        %v980 = vmul.f32 %v976, %v727
        %v981 = vmul.f32 %v976, %v731
        %v982 = vmul.f32 %v976, %v733
        %v983 = vmul.f32 %v976, %v737
        %v984 = vmul.f32 %v976, %v739
        %v985 = vmul.f32 %v976, %v743
        %v986 = vmul.f32 %v976, %v745
        %v987 = vmul.f32 %v976, %v749
        %v988 = vmul.f32 %v976, %v751
        %v989 = vmul.f32 %v976, %v755
        %v990 = vmul.f32 %v976, %v757
        %v991 = vmul.f32 %v976, %v761
        %v992 = vmul.f32 %v976, %v763
        %v993 = vmul.f32 %v976, %v767
        %v994 = vmul.f32 %v976, %v769
        %v995 = vmul.f32 %v976, %v773
        %v996 = vmul.f32 %v976, %v775
        %v997 = vmul.f32 %v976, %v779
        %v998 = vmul.f32 %v976, %v781
        %v999 = vmul.f32 %v976, %v785
        %v1000 = vmul.f32 %v976, %v787
        %v1001 = vmul.f32 %v976, %v791
        %v1002 = vmul.f32 %v976, %v793
        %v1003 = vmul.f32 %v976, %v797
        %v1004 = vmul.f32 %v976, %v799
        %v1005 = vmul.f32 %v976, %v803
        %v1006 = vmul.f32 %v976, %v805
        %v1007 = vmul.f32 %v976, %v809
        %v1008 = vmul.f32 %v976, %v811
        %v1009 = vmul.f32 %v976, %v815
        %v1010 = vmul.f32 %v976, %v817
        %v1011 = vmul.f32 %v976, %v821
        %v1012 = vmul.f32 %v976, %v823
        %v1013 = vmul.f32 %v976, %v827
        %v1014 = vmul.f32 %v976, %v829
        %v1015 = vmul.f32 %v976, %v833
        %v1016 = vmul.f32 %v976, %v835
        %v1017 = vmul.f32 %v976, %v839
        %v1018 = vmul.f32 %v976, %v841
        %v1019 = vmul.f32 %v976, %v845
        %v1020 = vmul.f32 %v976, %v847
        %v1021 = vmul.f32 %v976, %v851
        %v1022 = vmul.f32 %v976, %v853
        %v1023 = vmul.f32 %v976, %v857
        %v1024 = vmul.f32 %v976, %v859
        %v1025 = vmul.f32 %v976, %v863
        %v1026 = vmul.f32 %v976, %v865
        %v1027 = vmul.f32 %v976, %v869
        %v1028 = vmul.f32 %v976, %v871
        %v1029 = vmul.f32 %v976, %v875
        %v1030 = vmul.f32 %v976, %v877
        %v1031 = vmul.f32 %v976, %v881
        %v1032 = vmul.f32 %v976, %v883
        %v1033 = vmul.f32 %v976, %v887
        %v1034 = vmul.f32 %v976, %v889
        %v1035 = vmul.f32 %v976, %v893
        %v1036 = vmul.f32 %v976, %v895
        %v1037 = vmul.f32 %v976, %v899
        %v1038 = vmul.f32 %v976, %v901
        %v1039 = vmul.f32 %v976, %v905
        %v1040 = vmul.f32 %v976, %v907
        %v1041 = vadd.f32 %v911, %v977
        %v1042 = vadd.f32 %v912, %v978
        %v1043 = vadd.f32 %v913, %v979
        %v1044 = vadd.f32 %v914, %v980
        %v1045 = vadd.f32 %v915, %v981
        %v1046 = vadd.f32 %v916, %v982
        %v1047 = vadd.f32 %v917, %v983
        %v1048 = vadd.f32 %v918, %v984
        %v1049 = vadd.f32 %v919, %v985
        %v1050 = vadd.f32 %v920, %v986
        %v1051 = vadd.f32 %v921, %v987
        %v1052 = vadd.f32 %v922, %v988
        %v1053 = vadd.f32 %v923, %v989
        %v1054 = vadd.f32 %v924, %v990
        %v1055 = vadd.f32 %v925, %v991
        %v1056 = vadd.f32 %v926, %v992
        %v1057 = vadd.f32 %v927, %v993
        %v1058 = vadd.f32 %v928, %v994
        %v1059 = vadd.f32 %v929, %v995
        %v1060 = vadd.f32 %v930, %v996
        %v1061 = vadd.f32 %v931, %v997
        %v1062 = vadd.f32 %v932, %v998
        %v1063 = vadd.f32 %v933, %v999
        %v1064 = vadd.f32 %v934, %v1000
        %v1065 = vadd.f32 %v935, %v1001
        %v1066 = vadd.f32 %v936, %v1002
        %v1067 = vadd.f32 %v937, %v1003
        %v1068 = vadd.f32 %v938, %v1004
        %v1069 = vadd.f32 %v939, %v1005
        %v1070 = vadd.f32 %v940, %v1006
        %v1071 = vadd.f32 %v941, %v1007
        %v1072 = vadd.f32 %v942, %v1008
        %v1073 = vadd.f32 %v943, %v1009
        %v1074 = vadd.f32 %v944, %v1010
        %v1075 = vadd.f32 %v945, %v1011
        %v1076 = vadd.f32 %v946, %v1012
        %v1077 = vadd.f32 %v947, %v1013
        %v1078 = vadd.f32 %v948, %v1014
        %v1079 = vadd.f32 %v949, %v1015
        %v1080 = vadd.f32 %v950, %v1016
        %v1081 = vadd.f32 %v951, %v1017
        %v1082 = vadd.f32 %v952, %v1018
        %v1083 = vadd.f32 %v953, %v1019
        %v1084 = vadd.f32 %v954, %v1020
        %v1085 = vadd.f32 %v955, %v1021
        %v1086 = vadd.f32 %v956, %v1022
        %v1087 = vadd.f32 %v957, %v1023
        %v1088 = vadd.f32 %v958, %v1024
        %v1089 = vadd.f32 %v959, %v1025
        %v1090 = vadd.f32 %v960, %v1026
        %v1091 = vadd.f32 %v961, %v1027
        %v1092 = vadd.f32 %v962, %v1028
        %v1093 = vadd.f32 %v963, %v1029
        %v1094 = vadd.f32 %v964, %v1030
        %v1095 = vadd.f32 %v965, %v1031
        %v1096 = vadd.f32 %v966, %v1032
        %v1097 = vadd.f32 %v967, %v1033
        %v1098 = vadd.f32 %v968, %v1034
        %v1099 = vadd.f32 %v969, %v1035
        %v1100 = vadd.f32 %v970, %v1036
        %v1101 = vadd.f32 %v971, %v1037
        %v1102 = vadd.f32 %v972, %v1038
        %v1103 = vadd.f32 %v973, %v1039
        %v1104 = vadd.f32 %v974, %v1040
        %1105 = vst [vmem:[%s257] sm:$0xff] %v1041
        %1106 = vst [vmem:[%s257 + $0x8] sm:$0xff] %v1042
        %1107 = vst [vmem:[%s257 + $0x10] sm:$0xff] %v1043
        %1108 = vst [vmem:[%s257 + $0x18] sm:$0xff] %v1044
        %1109 = vst [vmem:[%s257 + $0x20] sm:$0xff] %v1045
        %1110 = vst [vmem:[%s257 + $0x28] sm:$0xff] %v1046
        %1111 = vst [vmem:[%s257 + $0x30] sm:$0xff] %v1047
        %1112 = vst [vmem:[%s257 + $0x38] sm:$0xff] %v1048
        %1113 = vst [vmem:[%s257 + $0x40] sm:$0xff] %v1049
        %1114 = vst [vmem:[%s257 + $0x48] sm:$0xff] %v1050
        %1115 = vst [vmem:[%s257 + $0x50] sm:$0xff] %v1051
        %1116 = vst [vmem:[%s257 + $0x58] sm:$0xff] %v1052
        %1117 = vst [vmem:[%s257 + $0x60] sm:$0xff] %v1053
        %1118 = vst [vmem:[%s257 + $0x68] sm:$0xff] %v1054
        %1119 = vst [vmem:[%s257 + $0x70] sm:$0xff] %v1055
        %1120 = vst [vmem:[%s257 + $0x78] sm:$0xff] %v1056
        %1121 = vst [vmem:[%s257 + $0x80] sm:$0xff] %v1057
        %1122 = vst [vmem:[%s257 + $0x88] sm:$0xff] %v1058
        %1123 = vst [vmem:[%s257 + $0x90] sm:$0xff] %v1059
        %1124 = vst [vmem:[%s257 + $0x98] sm:$0xff] %v1060
        %1125 = vst [vmem:[%s257 + $0xa0] sm:$0xff] %v1061
        %1126 = vst [vmem:[%s257 + $0xa8] sm:$0xff] %v1062
        %1127 = vst [vmem:[%s257 + $0xb0] sm:$0xff] %v1063
        %1128 = vst [vmem:[%s257 + $0xb8] sm:$0xff] %v1064
        %1129 = vst [vmem:[%s257 + $0xc0] sm:$0xff] %v1065
        %1130 = vst [vmem:[%s257 + $0xc8] sm:$0xff] %v1066
        %1131 = vst [vmem:[%s257 + $0xd0] sm:$0xff] %v1067
        %1132 = vst [vmem:[%s257 + $0xd8] sm:$0xff] %v1068
        %1133 = vst [vmem:[%s257 + $0xe0] sm:$0xff] %v1069
        %1134 = vst [vmem:[%s257 + $0xe8] sm:$0xff] %v1070
        %1135 = vst [vmem:[%s257 + $0xf0] sm:$0xff] %v1071
        %1136 = vst [vmem:[%s257 + $0xf8] sm:$0xff] %v1072
        %1137 = vst [vmem:[%s257 + $0x100] sm:$0xff] %v1073
        %1138 = vst [vmem:[%s257 + $0x108] sm:$0xff] %v1074
        %1139 = vst [vmem:[%s257 + $0x110] sm:$0xff] %v1075
        %1140 = vst [vmem:[%s257 + $0x118] sm:$0xff] %v1076
        %1141 = vst [vmem:[%s257 + $0x120] sm:$0xff] %v1077
        %1142 = vst [vmem:[%s257 + $0x128] sm:$0xff] %v1078
        %1143 = vst [vmem:[%s257 + $0x130] sm:$0xff] %v1079
        %1144 = vst [vmem:[%s257 + $0x138] sm:$0xff] %v1080
        %1145 = vst [vmem:[%s257 + $0x140] sm:$0xff] %v1081
        %1146 = vst [vmem:[%s257 + $0x148] sm:$0xff] %v1082
        %1147 = vst [vmem:[%s257 + $0x150] sm:$0xff] %v1083
        %1148 = vst [vmem:[%s257 + $0x158] sm:$0xff] %v1084
        %1149 = vst [vmem:[%s257 + $0x160] sm:$0xff] %v1085
        %1150 = vst [vmem:[%s257 + $0x168] sm:$0xff] %v1086
        %1151 = vst [vmem:[%s257 + $0x170] sm:$0xff] %v1087
        %1152 = vst [vmem:[%s257 + $0x178] sm:$0xff] %v1088
        %1153 = vst [vmem:[%s257 + $0x180] sm:$0xff] %v1089
        %1154 = vst [vmem:[%s257 + $0x188] sm:$0xff] %v1090
        %1155 = vst [vmem:[%s257 + $0x190] sm:$0xff] %v1091
        %1156 = vst [vmem:[%s257 + $0x198] sm:$0xff] %v1092
        %1157 = vst [vmem:[%s257 + $0x1a0] sm:$0xff] %v1093
        %1158 = vst [vmem:[%s257 + $0x1a8] sm:$0xff] %v1094
        %1159 = vst [vmem:[%s257 + $0x1b0] sm:$0xff] %v1095
        %1160 = vst [vmem:[%s257 + $0x1b8] sm:$0xff] %v1096
        %1161 = vst [vmem:[%s257 + $0x1c0] sm:$0xff] %v1097
        %1162 = vst [vmem:[%s257 + $0x1c8] sm:$0xff] %v1098
        %1163 = vst [vmem:[%s257 + $0x1d0] sm:$0xff] %v1099
        %1164 = vst [vmem:[%s257 + $0x1d8] sm:$0xff] %v1100
        %1165 = vst [vmem:[%s257 + $0x1e0] sm:$0xff] %v1101
        %1166 = vst [vmem:[%s257 + $0x1e8] sm:$0xff] %v1102
        %1167 = vst [vmem:[%s257 + $0x1f0] sm:$0xff] %v1103
        %1168 = vst [vmem:[%s257 + $0x1f8] sm:$0xff] %v1104
        %s1169 = sand.u32 %s141, 1
        %s1170 = scalar_lea.sflag [#allocation4], %s1169
        %s1171 = sand.u32 %s141, 1
        %s1172 = smul.addr %s1171, 512
        %s1173 = scalar_lea.vmem [#allocation7], %s1172
        // Predicated region
        $region49: #{spectral_cf_forward.1} parent=39 // pred_check
          %p1174 = pneg %p151
        $region50: #{spectral_cf_forward.1} parent=39 // pred_check_branch
          %1176 = sbr.rel (%p1174) target = $region52
        $region51: #{spectral_cf_forward.1} parent=39 // pred_region
          %s1177 = smul.u32 32, %s23
          %s1179 = ssub.s32 8192, 8192
          %1180 = vsyncadd %s1170, %s1179
          %s1181 = smul.addr %s1177, 2
          %s1182 = smul.addr %s1181, 128
          %s1183 = scalar_lea.hbm %s5, %s1182
          %s1184 = sshll.u32 %s1173, 4
          %s1185 = int_to_ptr.vmem [resolvable:$true] %s1184
          %1190 = dma.vmem_to_hbm [thread:$0]  %s1185, 8192, %s1183, %s1170, 256, 256, 16
        $region52: #{spectral_cf_forward.1} parent=39 // pred_fallthru
          _
      $region40: #{spectral_cf_forward.1} parent=5 // pred_fallthru
        _
      %p1191 = scmp.le.s32.totalorder 2, %s18
      // Predicated region
      $region53: #{spectral_cf_forward.1} parent=5 // pred_check
        %p1192 = pneg %p1191
      $region54: #{spectral_cf_forward.1} parent=5 // pred_check_branch
        %1194 = sbr.rel (%p1192) target = $region56
      $region55: #{spectral_cf_forward.1} parent=5 // pred_region
        %s1195 = ssub.s32 %s18, 2
        // Predicated region
        $region57: #{spectral_cf_forward.1} parent=55 // pred_check
          %p1196 = pneg %p157
        $region58: #{spectral_cf_forward.1} parent=55 // pred_check_branch
          %1198 = sbr.rel (%p1196) target = $region60
        $region59: #{spectral_cf_forward.1} parent=55 // pred_region
          %s1199 = sand.u32 %s142, 1
          %s1200 = scalar_lea.sflag [#allocation4], %s1199
          %s1201 = sand.u32 %s142, 1
          %s1202 = smul.addr %s1201, 512
          %s1203 = scalar_lea.vmem [#allocation7], %s1202
          %1204 = dma.done %s1200, 8192
        $region60: #{spectral_cf_forward.1} parent=55 // pred_fallthru
          _
      $region56: #{spectral_cf_forward.1} parent=5 // pred_fallthru
        _
    $region6: #{spectral_cf_forward.1} parent=1 // loop_footer
      %s22 = sadd.s32 1, %s18
    $region7: #{spectral_cf_forward.1} parent=1 // loop_footer_branch
      %17 = sbr.rel target = $region3
    $region8: #{spectral_cf_forward.1} parent=1 // loop_exit
      _
    %1205 = vsyncpa [#allocation3], 1
    %s1206 = scalar_lea.sflag [#allocation3], 1
    %1207 = vsyncpa %s1206, 1
    %1208 = vsyncpa [#allocation4], 1
    %s1209 = scalar_lea.sflag [#allocation4], 1
    %1210 = vsyncpa %s1209, 1
    %1211 = vsyncpa [#allocation5], 1
    %s1212 = scalar_lea.sflag [#allocation5], 1
    %1213 = vsyncpa %s1212, 1

</llo_original>
